<compile_context>
chip_gen: v7x
topology: tpu7x:2x2x1
jax: 0.10.0
libtpu: 0.0.40
codegen_flags: <defaults>
</compile_context>

<pallas_src>
import math

import jax
import jax.numpy as jnp
from jax.experimental import pallas as pl
from jax.experimental.pallas import tpu as pltpu


def _round_up(x, m):
    return ((x + m - 1) // m) * m


def _vmem_budget_bytes():
    """Generation-aware scoped-VMEM budget.

    v5e/v6e: 128 MiB physical -> ~96 MiB budget.  v7x: 64 MiB -> ~48 MiB.
    Falls back to a conservative value if the query is unavailable.
    """
    try:
        cap = getattr(pltpu.get_tpu_info(), "vmem_capacity_bytes", None)
    except Exception:
        cap = None
    if not cap:
        cap = 64 * 1024 * 1024
    return min((cap * 3) // 4, 100 * 1024 * 1024)


# ---------------- Phase 1: h = x @ W (feature projection) ----------------
def _proj_kernel(x_ref, w_ref, h_ref):
    # f32 blocks straight from HBM; bf16 cast on the VPU (native MXU dtype),
    # f32 accumulation; h stays f32 for phase-2 accuracy.
    h_ref[...] = jnp.dot(x_ref[...].astype(jnp.bfloat16),
                         w_ref[...].astype(jnp.bfloat16),
                         preferred_element_type=jnp.float32)


# ---------------- Phase 2 (primary): out[b] = adj[b] @ h[b] ----------------
def _agg_kernel(adj_ref, h_ref, o_ref):
    acc = jnp.dot(adj_ref[0].astype(jnp.bfloat16),
                  h_ref[0].astype(jnp.bfloat16),
                  preferred_element_type=jnp.float32)
    o_ref[0] = acc.astype(o_ref.dtype)


def _agg_kernel_bias(adj_ref, h_ref, b_ref, o_ref):
    acc = jnp.dot(adj_ref[0].astype(jnp.bfloat16),
                  h_ref[0].astype(jnp.bfloat16),
                  preferred_element_type=jnp.float32)
    o_ref[0] = (acc + b_ref[...]).astype(o_ref.dtype)


# ------ Phase 2 (fallback, huge h[b]): K-tiled accumulator over padded adj ------
def _agg_kernel_ktiled(adj_ref, h_ref, o_ref, acc_ref):
    k = pl.program_id(2)

    @pl.when(k == 0)
    def _():
        acc_ref[...] = jnp.zeros_like(acc_ref)

    acc_ref[...] += jnp.dot(adj_ref[0], h_ref[0],
                            preferred_element_type=jnp.float32)

    @pl.when(k == pl.num_programs(2) - 1)
    def _():
        o_ref[0] = acc_ref[...].astype(o_ref.dtype)


def graph_convolution(x, adj, weight, bias=None):
    """out = adj @ (x @ W) (+ bias).  x:(B,N,Fin) adj:(B,N,N) W:(Fin,Fout)."""
    B, N, Fin = x.shape
    Fout = weight.shape[1]
    assert adj.shape == (B, N, N)
    assert weight.shape == (Fin, Fout)
    out_dtype = x.dtype

    vmem_limit = _vmem_budget_bytes()
    tile_budget = (vmem_limit * 4) // 5  # headroom for compiler scratch

    # ----- Phase 1: projection, flattened over all B*N rows -----
    M = B * N
    x_flat = x.reshape(M, Fin)  # free reshape, no copy / cast pass

    def _proj_fits(tm):
        buf = 2 * (tm * Fin + Fin * Fout + tm * Fout) * 4   # double-buffered f32 blocks
        buf += (tm * Fin + Fin * Fout) * 2                   # in-kernel bf16 temporaries
        return buf <= tile_budget

    proj_cands = sorted(
        {M, *(c for c in (4096, 2048, 1024, 512, 256, 128, 64, 32, 16, 8) if c <= M)},
        reverse=True)
    tm_proj = next((c for c in proj_cands if _proj_fits(c)), 8)
    grid_m = pl.cdiv(M, tm_proj)

    proj_cost = pl.CostEstimate(
        flops=2 * M * Fin * Fout,
        transcendentals=0,
        bytes_accessed=(M * Fin + Fin * Fout + M * Fout) * 4,
    )
    h = pl.pallas_call(
        _proj_kernel,
        out_shape=jax.ShapeDtypeStruct((M, Fout), jnp.float32),
        grid_spec=pltpu.PrefetchScalarGridSpec(
            num_scalar_prefetch=0,
            grid=(grid_m,),
            in_specs=[
                pl.BlockSpec((tm_proj, Fin), lambda i: (i, 0)),
                # Constant block index: W is DMA'd once and stays resident.
                pl.BlockSpec((Fin, Fout), lambda i: (0, 0)),
            ],
            out_specs=pl.BlockSpec((tm_proj, Fout), lambda i: (i, 0)),
        ),
        compiler_params=pltpu.CompilerParams(
            dimension_semantics=("parallel",),
            vmem_limit_bytes=vmem_limit),
        cost_estimate=proj_cost,
    )(x_flat, weight)
    h = h.reshape(B, N, Fout)

    # ----- Phase 2: out[b] = adj[b] @ h[b] -----
    def _agg_fits(tm):
        buf = 2 * (tm * N + N * Fout + tm * Fout) * 4        # double-buffered f32 blocks
        buf += (tm * N + N * Fout) * 2                        # in-kernel bf16 temporaries
        return buf <= tile_budget

    agg_cands = sorted(
        {N, *(c for c in (2048, 1024, 512, 256, 128, 64, 32, 16, 8) if c <= N)},
        reverse=True)
    feasible = [c for c in agg_cands if _agg_fits(c)]

    if feasible:
        tm = feasible[0]
        if B == 1:
            # v7x megacore: with one batch, prefer an even (>=2) row-tile count
            # so both TensorCores get work (no effect on v5e/v6e).
            for c in feasible:
                nt = pl.cdiv(N, c)
                if nt >= 2 and nt % 2 == 0:
                    tm = c
                    break

        agg_cost = pl.CostEstimate(
            flops=2 * B * N * N * Fout,
            transcendentals=0,
            bytes_accessed=B * N * N * 4 + 2 * B * N * Fout * 4,
        )
        in_specs = [
            pl.BlockSpec((1, tm, N), lambda b, i: (b, i, 0)),
            # h[b] block index depends only on b -> fetched once per batch,
            # resident across all row tiles (no re-DMA, no K reduction axis).
            pl.BlockSpec((1, N, Fout), lambda b, i: (b, 0, 0)),
        ]
        operands = [adj, h]
        kernel = _agg_kernel
        if bias is not None:
            in_specs.append(pl.BlockSpec((1, Fout), lambda b, i: (0, 0)))
            operands.append(bias.reshape(1, Fout).astype(jnp.float32))
            kernel = _agg_kernel_bias

        return pl.pallas_call(
            kernel,
            out_shape=jax.ShapeDtypeStruct((B, N, Fout), out_dtype),
            grid_spec=pltpu.PrefetchScalarGridSpec(
                num_scalar_prefetch=0,
                grid=(B, pl.cdiv(N, tm)),
                in_specs=in_specs,
                out_specs=pl.BlockSpec((1, tm, Fout), lambda b, i: (b, i, 0)),
            ),
            compiler_params=pltpu.CompilerParams(
                dimension_semantics=("parallel", "parallel"),
                vmem_limit_bytes=vmem_limit),
            cost_estimate=agg_cost,
        )(*operands)

    # ----- rare fallback: h[b] does not fit VMEM -> pad + K-tiled accumulator -----
    N_p = _round_up(N, 128)
    adj_p = jnp.zeros((B, N_p, N_p), jnp.bfloat16).at[:, :N, :N].set(
        adj.astype(jnp.bfloat16))
    h_p = jnp.zeros((B, N_p, Fout), jnp.bfloat16).at[:, :N, :].set(
        h.astype(jnp.bfloat16))

    def _k_fits(tm, tk):
        buf = 2 * (tm * tk + tk * Fout) * 2 + 2 * tm * Fout * 4 + tm * Fout * 4
        return buf <= tile_budget

    best = (128, 128)
    for ctm in (512, 256, 128):
        for ctk in (2048, 1024, 512, 256, 128):
            if N_p % ctm == 0 and N_p % ctk == 0 and _k_fits(ctm, ctk):
                if ctm * ctk > best[0] * best[1]:
                    best = (ctm, ctk)
    tm, tk = best

    out_p = pl.pallas_call(
        _agg_kernel_ktiled,
        out_shape=jax.ShapeDtypeStruct((B, N_p, Fout), out_dtype),
        grid_spec=pltpu.PrefetchScalarGridSpec(
            num_scalar_prefetch=0,
            grid=(B, N_p // tm, N_p // tk),
            in_specs=[
                pl.BlockSpec((1, tm, tk), lambda b, i, k: (b, i, k)),
                pl.BlockSpec((1, tk, Fout), lambda b, i, k: (b, k, 0)),
            ],
            out_specs=pl.BlockSpec((1, tm, Fout), lambda b, i, k: (b, i, 0)),
            scratch_shapes=[pltpu.VMEM((tm, Fout), jnp.float32)],
        ),
        compiler_params=pltpu.CompilerParams(
            dimension_semantics=("parallel", "parallel", "arbitrary"),
            vmem_limit_bytes=vmem_limit),
    )(adj_p, h_p)
    out = out_p[:, :N, :]
    if bias is not None:
        out = out + bias.astype(out.dtype)
    return out


def init_weight(key, in_features, out_features):
    # Matches reset_parameters(): uniform(-stdv, stdv), stdv = 1/sqrt(out_features)
    stdv = 1.0 / math.sqrt(out_features)
    return jax.random.uniform(key, (in_features, out_features),
                              dtype=jnp.float32, minval=-stdv, maxval=stdv)


if __name__ == "__main__":
    B, N, Fin, Fout = 2, 8, 16, 32

    key = jax.random.PRNGKey(0)
    kx, kadj, kw = jax.random.split(key, 3)

    x = jax.random.normal(kx, (B, N, Fin), dtype=jnp.float32)
    a = jax.random.uniform(kadj, (B, N, N), dtype=jnp.float32)
    adj = (a + jnp.transpose(a, (0, 2, 1))) * 0.5  # simple symmetric adjacency
    weight = init_weight(kw, Fin, Fout)

    out = graph_convolution(x, adj, weight)
    out = jax.block_until_ready(out)

    # float32 reference of the PyTorch forward
    h_ref = x.reshape(B * N, Fin) @ weight
    ref = jnp.einsum("bij,bjf->bif", adj, h_ref.reshape(B, N, Fout))
    assert out.shape == (B, N, Fout)
    # bf16 MXU inputs (f32 accumulation) -> loosened tolerance
    max_err = float(jnp.max(jnp.abs(out - ref)))
    assert jnp.allclose(out, ref, atol=5e-2, rtol=5e-2), max_err

    print("KERNEL_OK")
</pallas_src>

<mosaic_0001>
module attributes {stable_mosaic.version = 11 : i64} {
  func.func @_proj_kernel(%arg0: i32, %arg1: memref<16x16xf32, #tpu.memory_space<vmem>>, %arg2: memref<16x32xf32, #tpu.memory_space<vmem>>, %arg3: memref<16x32xf32, #tpu.memory_space<vmem>>) attributes {dimension_semantics = [#tpu.dimension_semantics<parallel>], iteration_bounds = array<i64: 1>, scalar_prefetch = 0 : i64, scratch_operands = 0 : i64, tpu.core_type = #tpu.core_type<tc>, window_params = [{transform_indices = @transform_0, window_bounds = array<i64: 16, 16>}, {pipeline_mode = #tpu.pipeline_mode<synchronous>, transform_indices = @transform_1, window_bounds = array<i64: 16, 32>}, {transform_indices = @transform_2, window_bounds = array<i64: 16, 32>}]} {
    %c0 = arith.constant 0 : index
    %c0_0 = arith.constant 0 : index
    %0 = vector.load %arg1[%c0, %c0_0] : memref<16x16xf32, #tpu.memory_space<vmem>>, vector<16x16xf32>
    %1 = arith.truncf %0 : vector<16x16xf32> to vector<16x16xbf16>
    %c0_1 = arith.constant 0 : index
    %c0_2 = arith.constant 0 : index
    %2 = vector.load %arg2[%c0_1, %c0_2] : memref<16x32xf32, #tpu.memory_space<vmem>>, vector<16x32xf32>
    %3 = arith.truncf %2 : vector<16x32xf32> to vector<16x32xbf16>
    %cst = arith.constant dense<0.000000e+00> : vector<16x32xf32>
    %4 = tpu.matmul %1, %3, %cst {dimension_numbers = #tpu.dot_dimension_numbers<[1], [0], [0], [1], [0, 0, 1, 1], [], []>} : vector<16x16xbf16>, vector<16x32xbf16>, vector<16x32xf32> -> vector<16x32xf32>
    %c0_3 = arith.constant 0 : index
    %c0_4 = arith.constant 0 : index
    %5 = vector.load %arg3[%c0_3, %c0_4] : memref<16x32xf32, #tpu.memory_space<vmem>>, vector<16x32xf32>
    tpu.vector_store %arg3[%c0_3, %c0_4], %4 {strides = array<i32>} : memref<16x32xf32, #tpu.memory_space<vmem>>, vector<16x32xf32>,
    return
  }
  func.func @transform_0(%arg0: i32) -> (i32, i32) {
    %c0_i32 = arith.constant 0 : i32
    %c0_i32_0 = arith.constant 0 : i32
    return %arg0, %c0_i32 : i32, i32
  }
  func.func @transform_1(%arg0: i32) -> (i32, i32) {
    %c0_i32 = arith.constant 0 : i32
    %c0_i32_0 = arith.constant 0 : i32
    %c0_i32_1 = arith.constant 0 : i32
    return %c0_i32, %c0_i32_0 : i32, i32
  }
  func.func @transform_2(%arg0: i32) -> (i32, i32) {
    %c0_i32 = arith.constant 0 : i32
    %c0_i32_0 = arith.constant 0 : i32
    return %arg0, %c0_i32 : i32, i32
  }
}

</mosaic_0001>

<llo_original>
// kernel: tpu_custom_call.1
$region0: #{tpu_custom_call.1}
  #allocation0 [shape = 'u32[]', space=smem, size = 0x4, offset = 0x4, fixed_abs, tag = 'smem constant byte address 0x4 - core index']
  #allocation1 [shape = 'u32[144,128]{1,0:T(1,128)}', space=vmem, size = 0x12000, scoped, tag = 'internal scratch']
  %s0 = inlined_call_operand.hbm [shape: f32[16,16], index: 0, kind: input, shape index: {}]
  %s1 = inlined_call_operand.hbm [shape: f32[16,32], index: 1, kind: input, shape index: {}]
  %s2 = inlined_call_operand.hbm [shape: f32[16,32], index: 2, kind: output, shape index: {}]
  %s3 = sld [smem:[#allocation0]]
  $region26: #{tpu_custom_call.1} parent=0
    _
  %s5 = ssub.s32 1, %s3
  %s6 = scalar_select 0, %s5, %s3
  $region1: #{tpu_custom_call.1} parent=0
    #allocation2 [shape = 'u8[8192]{0}', space=vmem, size = 0x2000, scoped, tag = 'input window, operand 0, single buffered']
    #allocation3 [shape = 's32[1]{0}', space=sflag, size = 0x4, scoped, tag = 'scoped memory for tpu_custom_call.1']
    #allocation4 [shape = 's32[1]{0}', space=sflag, size = 0x4, scoped, tag = 'scoped memory for tpu_custom_call.1']
    #allocation5 [shape = 'u8[8192]{0}', space=vmem, size = 0x2000, scoped, tag = 'input window, operand 1, single buffered']
    #allocation6 [shape = 's32[1]{0}', space=sflag, size = 0x4, scoped, tag = 'scoped memory for tpu_custom_call.1']
    #allocation7 [shape = 'u8[8192]{0}', space=vmem, size = 0x2000, scoped, tag = 'output window, operand 0, single buffered']
    %7 = vsyncpa [#allocation3], 0
    %8 = vsyncpa [#allocation6], 0
    %9 = vsyncpa [#allocation4], 0
    // Predicated region
    $region2: #{tpu_custom_call.1} parent=1 // pred_check
      _
    $region3: #{tpu_custom_call.1} parent=1 // pred_check_branch
      %11 = sbr.rel (0) target = $region5
    $region4: #{tpu_custom_call.1} parent=1 // pred_region
      %s13 = ssub.s32 256, 256
      %14 = vsyncadd [#allocation3], %s13
      %s15 = sshll.u32 [#allocation2], 4
      %s16 = int_to_ptr.vmem [resolvable:$true] %s15
      %21 = dma.hbm_to_vmem [thread:$0]  %s0, 256, %s16, [#allocation3], 128, 128, 8
    $region5: #{tpu_custom_call.1} parent=1 // pred_fallthru
      _
    // Predicated region
    $region6: #{tpu_custom_call.1} parent=1 // pred_check
      _
    $region7: #{tpu_custom_call.1} parent=1 // pred_check_branch
      %23 = sbr.rel (0) target = $region9
    $region8: #{tpu_custom_call.1} parent=1 // pred_region
      %s25 = ssub.s32 256, 256
      %26 = vsyncadd [#allocation6], %s25
      %s27 = sshll.u32 [#allocation5], 4
      %s28 = int_to_ptr.vmem [resolvable:$true] %s27
      %33 = dma.hbm_to_vmem [thread:$0]  %s1, 256, %s28, [#allocation6], 128, 128, 8
    $region9: #{tpu_custom_call.1} parent=1 // pred_fallthru
      _
    // Predicated region
    $region10: #{tpu_custom_call.1} parent=1 // pred_check
      _
    $region11: #{tpu_custom_call.1} parent=1 // pred_check_branch
      %35 = sbr.rel (0) target = $region13
    $region12: #{tpu_custom_call.1} parent=1 // pred_region
      %36 = dma.done [#allocation3], 256
    $region13: #{tpu_custom_call.1} parent=1 // pred_fallthru
      _
    // Predicated region
    $region14: #{tpu_custom_call.1} parent=1 // pred_check
      _
    $region15: #{tpu_custom_call.1} parent=1 // pred_check_branch
      %38 = sbr.rel (0) target = $region17
    $region16: #{tpu_custom_call.1} parent=1 // pred_region
      %39 = dma.done [#allocation6], 256
    $region17: #{tpu_custom_call.1} parent=1 // pred_fallthru
      _
    %v41 = vld [vmem:[#allocation2] sm:$0xff]
    %v42 = vld [vmem:[#allocation2 + $0x8] sm:$0xff]
    %v43 = vpack.c.bf16 %v42, %v41
    %v44 = vld [vmem:[#allocation5] sm:$0xff]
    %v45 = vld [vmem:[#allocation5 + $0x8] sm:$0xff]
    %v46 = vpack.c.bf16 %v45, %v44
    %vm47 = vcmask 130048
    %v49 = vsel %vm47, %v43, 0
    %51 = vmatprep.subr.bf16.mxu0 0
    %52 = vmatpush1.bf16.msra.mxu0 %v46
    %53 = vmatprep.subr.bf16.mxu0 0
    %54 = vmatpush1.bf16.msra.mxu0 0
    %55 = vmatprep.subr.bf16.mxu0 0
    %56 = vmatpush1.bf16.msra.mxu0 0
    %57 = vmatprep.subr.bf16.mxu0 0
    %58 = vmatpush1.bf16.msra.mxu0 0
    %59 = vmatprep.subr.bf16.mxu0 0
    %60 = vmatpush1.bf16.msra.mxu0 0
    %61 = vmatprep.subr.bf16.mxu0 0
    %62 = vmatpush1.bf16.msra.mxu0 0
    %63 = vmatprep.subr.bf16.mxu0 0
    %64 = vmatpush1.bf16.msra.mxu0 0
    %65 = vmatprep.subr.bf16.mxu0 0
    %66 = vmatpush1.bf16.msra.mxu0 0
    %67 = vmatprep.subr.bf16.mxu0 0
    %68 = vmatpush1.bf16.msra.mxu0 0
    %69 = vmatprep.subr.bf16.mxu0 0
    %70 = vmatpush1.bf16.msra.mxu0 0
    %71 = vmatprep.subr.bf16.mxu0 0
    %72 = vmatpush1.bf16.msra.mxu0 0
    %73 = vmatprep.subr.bf16.mxu0 0
    %74 = vmatpush1.bf16.msra.mxu0 0
    %75 = vmatprep.subr.bf16.mxu0 0
    %76 = vmatpush1.bf16.msra.mxu0 0
    %77 = vmatprep.subr.bf16.mxu0 0
    %78 = vmatpush1.bf16.msra.mxu0 0
    %79 = vmatprep.subr.bf16.mxu0 0
    %80 = vmatpush1.bf16.msra.mxu0 0
    %81 = vmatprep.subr.bf16.mxu0 0
    %82 = vmatpush1.bf16.msra.mxu0 0
    %83 = vmatprep.mubr.bf16.mxu0 0
    %84 = vmatmul.mubr.bf16.gmra.mrb[0].mxu0 %v49
    %v85 = vpop.f32.mrb[0].mxu0
    %v86 = vadd.f32 0.0, %v85
    %v87 = vpop.f32.mrb[0].mxu0
    %v88 = vpop.f32.mrb[0].mxu0
    %v89 = vadd.f32 0.0, %v88
    %v90 = vpop.f32.mrb[0].mxu0
    %91 = vdwg.mxu0
    %vm92 = vcmask 261120
    %93 = vst.msk [vmem:[#allocation7] sm:$0xff] %vm92, %v86
    %94 = vst.msk [vmem:[#allocation7 + $0x8] sm:$0xff] %vm92, %v89
    // Predicated region
    $region18: #{tpu_custom_call.1} parent=1 // pred_check
      _
    $region19: #{tpu_custom_call.1} parent=1 // pred_check_branch
      %96 = sbr.rel (0) target = $region21
    $region20: #{tpu_custom_call.1} parent=1 // pred_region
      %s98 = ssub.s32 256, 256
      %99 = vsyncadd [#allocation4], %s98
      %s100 = sshll.u32 [#allocation7], 4
      %s101 = int_to_ptr.vmem [resolvable:$true] %s100
      %106 = dma.vmem_to_hbm [thread:$0]  %s101, 256, %s2, [#allocation4], 128, 128, 8
    $region21: #{tpu_custom_call.1} parent=1 // pred_fallthru
      _
    // Predicated region
    $region22: #{tpu_custom_call.1} parent=1 // pred_check
      _
    $region23: #{tpu_custom_call.1} parent=1 // pred_check_branch
      %108 = sbr.rel (0) target = $region25
    $region24: #{tpu_custom_call.1} parent=1 // pred_region
      %109 = dma.done [#allocation4], 256
    $region25: #{tpu_custom_call.1} parent=1 // pred_fallthru
      _
    %110 = vsyncpa [#allocation3], 1
    %111 = vsyncpa [#allocation6], 1
    %112 = vsyncpa [#allocation4], 1

</llo_original>
